<compile_context>
chip_gen: v5e
topology: v5e:2x2
jax: 0.10.0
libtpu: 0.0.40
codegen_flags: <defaults>
</compile_context>

<pallas_src>
import functools

import jax
import jax.numpy as jnp
from jax.experimental import pallas as pl
from jax.experimental.pallas import tpu as pltpu


def _triplet_loss_kernel(a_ref, p_ref, n_ref, o_ref, *, margin, eps, batch, tile_rows):
    i = pl.program_id(0)

    a = a_ref[...].astype(jnp.float32)
    p = p_ref[...].astype(jnp.float32)
    n = n_ref[...].astype(jnp.float32)

    # F.pairwise_distance adds eps to the difference before the norm.
    d_pos = a - p + eps
    d_neg = a - n + eps

    # Squared L2 distances directly (no sqrt->square round trip), kept 2-D.
    sq_pos = jnp.sum(d_pos * d_pos, axis=-1, keepdims=True)   # (TB, 1)
    sq_neg = jnp.sum(d_neg * d_neg, axis=-1, keepdims=True)   # (TB, 1)

    loss = jnp.maximum(sq_pos - sq_neg + margin, 0.0)          # (TB, 1)

    # Mask rows past the true batch size (tail tile), so padding never adds `margin`.
    row = jax.lax.broadcasted_iota(jnp.int32, loss.shape, 0) + i * tile_rows
    loss = jnp.where(row < batch, loss, 0.0)

    # Per-tile partial sum -> SMEM scalar for this grid step.
    o_ref[0, 0] = jnp.sum(loss)


def _pick_tile_rows(batch, dim, itemsize, vmem_budget_bytes=8 << 20):
    """Largest multiple-of-8 row tile such that 3 inputs x 2 pipeline buffers fit
    comfortably under the scoped-VMEM limits of v5e/v6e/v7x."""
    tb = vmem_budget_bytes // (6 * dim * itemsize)
    tb = max(8, (tb // 8) * 8)
    tb = min(tb, 1024)          # cap per-step size; per-step overhead is ~0.35us
    if tb >= batch:
        return batch            # single block equal to the full batch dim
    return tb                   # multiple of 8; tail tile handled by masking


def triplet_loss(anchor, positive, negative, margin=1.0, eps=1e-6, tile_rows=None):
    """Pallas TPU triplet loss. anchor/positive/negative: (B, D) float arrays."""
    assert anchor.shape == positive.shape == negative.shape
    assert anchor.ndim == 2
    B, D = anchor.shape

    itemsize = jnp.dtype(anchor.dtype).itemsize
    if tile_rows is None:
        tile_rows = _pick_tile_rows(B, D, itemsize)
    num_tiles = pl.cdiv(B, tile_rows)

    kernel = functools.partial(
        _triplet_loss_kernel,
        margin=float(margin),
        eps=float(eps),
        batch=B,
        tile_rows=tile_rows,
    )

    in_spec = pl.BlockSpec((tile_rows, D), lambda i: (i, 0))
    partials = pl.pallas_call(
        kernel,
        out_shape=jax.ShapeDtypeStruct((num_tiles, 1), jnp.float32),
        grid=(num_tiles,),
        in_specs=[in_spec, in_spec, in_spec],
        out_specs=pl.BlockSpec((1, 1), lambda i: (i, 0), memory_space=pltpu.SMEM),
        compiler_params=pltpu.CompilerParams(
            dimension_semantics=("parallel",),  # independent tiles -> megacore-friendly
        ),
    )(anchor, positive, negative)

    # Final reduction over per-tile partials; divide by the true batch size.
    return jnp.sum(partials) / B


def _reference(anchor, positive, negative, margin=1.0, eps=1e-6):
    dp = jnp.sqrt(jnp.sum((anchor - positive + eps) ** 2, axis=-1))
    dn = jnp.sqrt(jnp.sum((anchor - negative + eps) ** 2, axis=-1))
    return jnp.mean(jnp.maximum(dp ** 2 - dn ** 2 + margin, 0.0))


if __name__ == "__main__":
    key = jax.random.PRNGKey(0)

    # Case 1: small batch, single tile (module's natural (B, D) embedding layout).
    k_a, k_p, k_n, k2 = jax.random.split(key, 4)
    B, D = 8, 32
    anchor = jax.random.normal(k_a, (B, D), dtype=jnp.float32)
    positive = jax.random.normal(k_p, (B, D), dtype=jnp.float32)
    negative = jax.random.normal(k_n, (B, D), dtype=jnp.float32)

    loss = triplet_loss(anchor, positive, negative, margin=1.0)
    jax.block_until_ready(loss)
    ref = _reference(anchor, positive, negative, margin=1.0)
    assert jnp.allclose(loss, ref, rtol=1e-5, atol=1e-5), (loss, ref)

    # Case 2: multi-tile grid with a masked partial tail tile (B=20, TB=8 -> 3 tiles).
    k_a2, k_p2, k_n2 = jax.random.split(k2, 3)
    B2, D2 = 20, 64
    anchor2 = jax.random.normal(k_a2, (B2, D2), dtype=jnp.float32)
    positive2 = jax.random.normal(k_p2, (B2, D2), dtype=jnp.float32)
    negative2 = jax.random.normal(k_n2, (B2, D2), dtype=jnp.float32)

    loss2 = triplet_loss(anchor2, positive2, negative2, margin=1.0, tile_rows=8)
    jax.block_until_ready(loss2)
    ref2 = _reference(anchor2, positive2, negative2, margin=1.0)
    assert jnp.allclose(loss2, ref2, rtol=1e-5, atol=1e-5), (loss2, ref2)

    print("KERNEL_OK")
</pallas_src>

<mosaic_0001>
module attributes {stable_mosaic.version = 11 : i64} {
  func.func @_triplet_loss_kernel(%arg0: i32, %arg1: memref<8x32xf32, #tpu.memory_space<vmem>>, %arg2: memref<8x32xf32, #tpu.memory_space<vmem>>, %arg3: memref<8x32xf32, #tpu.memory_space<vmem>>, %arg4: memref<1x1xf32, #tpu.memory_space<smem>>) attributes {dimension_semantics = [#tpu.dimension_semantics<parallel>], iteration_bounds = array<i64: 1>, scalar_prefetch = 0 : i64, scratch_operands = 0 : i64, tpu.core_type = #tpu.core_type<tc>, window_params = [{transform_indices = @transform_0, window_bounds = array<i64: 8, 32>}, {transform_indices = @transform_1, window_bounds = array<i64: 8, 32>}, {transform_indices = @transform_2, window_bounds = array<i64: 8, 32>}, {transform_indices = @transform_3, window_bounds = array<i64: 1, 1>}]} {
    %c0 = arith.constant 0 : index
    %c0_0 = arith.constant 0 : index
    %0 = vector.load %arg1[%c0, %c0_0] : memref<8x32xf32, #tpu.memory_space<vmem>>, vector<8x32xf32>
    %c0_1 = arith.constant 0 : index
    %c0_2 = arith.constant 0 : index
    %1 = vector.load %arg2[%c0_1, %c0_2] : memref<8x32xf32, #tpu.memory_space<vmem>>, vector<8x32xf32>
    %c0_3 = arith.constant 0 : index
    %c0_4 = arith.constant 0 : index
    %2 = vector.load %arg3[%c0_3, %c0_4] : memref<8x32xf32, #tpu.memory_space<vmem>>, vector<8x32xf32>
    %3 = arith.subf %0, %1 : vector<8x32xf32>
    %cst = arith.constant 9.99999997E-7 : f32
    %4 = vector.broadcast %cst : f32 to vector<8x32xf32>
    %5 = arith.addf %3, %4 : vector<8x32xf32>
    %6 = arith.subf %0, %2 : vector<8x32xf32>
    %cst_5 = arith.constant 9.99999997E-7 : f32
    %7 = vector.broadcast %cst_5 : f32 to vector<8x32xf32>
    %8 = arith.addf %6, %7 : vector<8x32xf32>
    %9 = arith.mulf %5, %5 : vector<8x32xf32>
    %cst_6 = arith.constant dense<0.000000e+00> : vector<8xf32>
    %10 = vector.multi_reduction <add>, %9, %cst_6 [1] : vector<8x32xf32> to vector<8xf32>
    %11 = vector.shape_cast %10 : vector<8xf32> to vector<8x1xf32>
    %12 = arith.mulf %8, %8 : vector<8x32xf32>
    %cst_7 = arith.constant dense<0.000000e+00> : vector<8xf32>
    %13 = vector.multi_reduction <add>, %12, %cst_7 [1] : vector<8x32xf32> to vector<8xf32>
    %14 = vector.shape_cast %13 : vector<8xf32> to vector<8x1xf32>
    %15 = arith.subf %11, %14 : vector<8x1xf32>
    %cst_8 = arith.constant 1.000000e+00 : f32
    %16 = vector.broadcast %cst_8 : f32 to vector<8x1xf32>
    %17 = arith.addf %15, %16 : vector<8x1xf32>
    %cst_9 = arith.constant 0.000000e+00 : f32
    %18 = vector.broadcast %cst_9 : f32 to vector<8x1xf32>
    %19 = arith.maximumf %17, %18 : vector<8x1xf32>
    %20 = tpu.iota {dimensions = array<i32: 0>} : vector<8x1xi32>
    %c8_i32 = arith.constant 8 : i32
    %21 = arith.muli %arg0, %c8_i32 : i32
    %22 = vector.broadcast %21 : i32 to vector<8x1xi32>
    %23 = arith.addi %20, %22 : vector<8x1xi32>
    %c8_i32_10 = arith.constant 8 : i32
    %24 = vector.broadcast %c8_i32_10 : i32 to vector<8x1xi32>
    %25 = arith.cmpi slt, %23, %24 : vector<8x1xi32>
    %cst_11 = arith.constant 0.000000e+00 : f32
    %26 = vector.broadcast %cst_11 : f32 to vector<8x1xf32>
    %27 = arith.select %25, %19, %26 : vector<8x1xi1>, vector<8x1xf32>
    %28 = vector.shape_cast %27 : vector<8x1xf32> to vector<1x8x1xf32>
    %cst_12 = arith.constant dense<0.000000e+00> : vector<1xf32>
    %29 = vector.multi_reduction <add>, %28, %cst_12 [1, 2] : vector<1x8x1xf32> to vector<1xf32>
    %30 = vector.shape_cast %29 : vector<1xf32> to vector<1x1x1xf32>
    %31 = vector.extract %30[0, 0, 0] : f32 from vector<1x1x1xf32>
    %c0_13 = arith.constant 0 : index
    %c0_14 = arith.constant 0 : index
    %32 = memref.load %arg4[%c0_13, %c0_14] : memref<1x1xf32, #tpu.memory_space<smem>>
    memref.store %31, %arg4[%c0_13, %c0_14] : memref<1x1xf32, #tpu.memory_space<smem>>
    return
  }
  func.func @transform_0(%arg0: i32) -> (i32, i32) {
    %c0_i32 = arith.constant 0 : i32
    %c0_i32_0 = arith.constant 0 : i32
    return %arg0, %c0_i32 : i32, i32
  }
  func.func @transform_1(%arg0: i32) -> (i32, i32) {
    %c0_i32 = arith.constant 0 : i32
    %c0_i32_0 = arith.constant 0 : i32
    return %arg0, %c0_i32 : i32, i32
  }
  func.func @transform_2(%arg0: i32) -> (i32, i32) {
    %c0_i32 = arith.constant 0 : i32
    %c0_i32_0 = arith.constant 0 : i32
    return %arg0, %c0_i32 : i32, i32
  }
  func.func @transform_3(%arg0: i32) -> (i32, i32) {
    %c0_i32 = arith.constant 0 : i32
    %c0_i32_0 = arith.constant 0 : i32
    return %arg0, %c0_i32 : i32, i32
  }
}

</mosaic_0001>

<llo_original>
// kernel: tpu_custom_call.1
$region0: #{tpu_custom_call.1}
  #allocation0 [shape = 'u32[]', space=smem, size = 0x4, offset = 0x4, fixed_abs, tag = 'smem constant byte address 0x4 - core index']
  #allocation1 [shape = 'u32[72,128]{1,0:T(1,128)}', space=vmem, size = 0x9000, scoped, tag = 'internal scratch']
  %s0 = inlined_call_operand.hbm [shape: f32[8,32], index: 0, kind: input, shape index: {}]
  %s1 = inlined_call_operand.hbm [shape: f32[8,32], index: 1, kind: input, shape index: {}]
  %s2 = inlined_call_operand.hbm [shape: f32[8,32], index: 2, kind: input, shape index: {}]
  %s3 = inlined_call_operand.hbm [shape: f32[1,1], index: 3, kind: output, shape index: {}]
  %s4 = sld [smem:[#allocation0]]
  $region34: #{tpu_custom_call.1} parent=0
    _
  %s6 = ssub.s32 1, %s4
  %s7 = scalar_select 0, %s6, %s4
  $region1: #{tpu_custom_call.1} parent=0
    #allocation2 [shape = 'u8[4096]{0}', space=vmem, size = 0x1000, scoped, tag = 'input window, operand 0, single buffered']
    #allocation3 [shape = 's32[1]{0}', space=sflag, size = 0x4, scoped, tag = 'scoped memory for tpu_custom_call.1']
    #allocation4 [shape = 's32[1]{0}', space=sflag, size = 0x4, scoped, tag = 'scoped memory for tpu_custom_call.1']
    #allocation5 [shape = 'u8[4096]{0}', space=vmem, size = 0x1000, scoped, tag = 'input window, operand 1, single buffered']
    #allocation6 [shape = 's32[1]{0}', space=sflag, size = 0x4, scoped, tag = 'scoped memory for tpu_custom_call.1']
    #allocation7 [shape = 'u8[4096]{0}', space=vmem, size = 0x1000, scoped, tag = 'input window, operand 2, single buffered']
    #allocation8 [shape = 'u8[512]{0}', space=smem, size = 0x200, scoped, tag = 'output window, operand 0, single buffered']
    %8 = vsyncpa [#allocation3], 0
    %9 = vsyncpa [#allocation6], 0
    %10 = vsyncpa [#allocation4], 0
    // Predicated region
    $region2: #{tpu_custom_call.1} parent=1 // pred_check
      _
    $region3: #{tpu_custom_call.1} parent=1 // pred_check_branch
      %12 = sbr.rel (0) target = $region5
    $region4: #{tpu_custom_call.1} parent=1 // pred_region
      %14 = vsyncadd [#allocation3], 0
      %s16 = sshll.u32 %s0, 4
      %s17 = int_to_ptr.hbm [resolvable:$true] %s16
      %s18 = sshll.u32 [#allocation2], 4
      %s19 = int_to_ptr.vmem [resolvable:$true] %s18
      %21 = dma.hbm_to_vmem [thread:$0]  %s17, 128, %s19, [#allocation3]
    $region5: #{tpu_custom_call.1} parent=1 // pred_fallthru
      _
    // Predicated region
    $region6: #{tpu_custom_call.1} parent=1 // pred_check
      _
    $region7: #{tpu_custom_call.1} parent=1 // pred_check_branch
      %23 = sbr.rel (0) target = $region9
    $region8: #{tpu_custom_call.1} parent=1 // pred_region
      %25 = vsyncadd [#allocation6], 0
      %s27 = sshll.u32 %s1, 4
      %s28 = int_to_ptr.hbm [resolvable:$true] %s27
      %s29 = sshll.u32 [#allocation5], 4
      %s30 = int_to_ptr.vmem [resolvable:$true] %s29
      %32 = dma.hbm_to_vmem [thread:$0]  %s28, 128, %s30, [#allocation6]
    $region9: #{tpu_custom_call.1} parent=1 // pred_fallthru
      _
    // Predicated region
    $region10: #{tpu_custom_call.1} parent=1 // pred_check
      _
    $region11: #{tpu_custom_call.1} parent=1 // pred_check_branch
      %34 = sbr.rel (0) target = $region13
    $region12: #{tpu_custom_call.1} parent=1 // pred_region
      %36 = vsyncadd [#allocation6], 0
      %s38 = sshll.u32 %s2, 4
      %s39 = int_to_ptr.hbm [resolvable:$true] %s38
      %s40 = sshll.u32 [#allocation7], 4
      %s41 = int_to_ptr.vmem [resolvable:$true] %s40
      %43 = dma.hbm_to_vmem [thread:$0]  %s39, 128, %s41, [#allocation6]
    $region13: #{tpu_custom_call.1} parent=1 // pred_fallthru
      _
    // Predicated region
    $region14: #{tpu_custom_call.1} parent=1 // pred_check
      _
    $region15: #{tpu_custom_call.1} parent=1 // pred_check_branch
      %45 = sbr.rel (0) target = $region17
    $region16: #{tpu_custom_call.1} parent=1 // pred_region
      %47 = dma.done [#allocation3], 128
    $region17: #{tpu_custom_call.1} parent=1 // pred_fallthru
      _
    // Predicated region
    $region18: #{tpu_custom_call.1} parent=1 // pred_check
      _
    $region19: #{tpu_custom_call.1} parent=1 // pred_check_branch
      %49 = sbr.rel (0) target = $region21
    $region20: #{tpu_custom_call.1} parent=1 // pred_region
      %51 = dma.done [#allocation6], 128
    $region21: #{tpu_custom_call.1} parent=1 // pred_fallthru
      _
    // Predicated region
    $region22: #{tpu_custom_call.1} parent=1 // pred_check
      _
    $region23: #{tpu_custom_call.1} parent=1 // pred_check_branch
      %53 = sbr.rel (0) target = $region25
    $region24: #{tpu_custom_call.1} parent=1 // pred_region
      %55 = dma.done [#allocation6], 128
    $region25: #{tpu_custom_call.1} parent=1 // pred_fallthru
      _
    %v56 = vld [vmem:[#allocation2] sm:$0xff]
    %v57 = vld [vmem:[#allocation5] sm:$0xff]
    %v58 = vld [vmem:[#allocation7] sm:$0xff]
    %v59 = vsub.f32 %v56, %v57
    %v60 = vadd.f32 %v59, 1e-06
    %v61 = vsub.f32 %v56, %v58
    %v62 = vadd.f32 %v61, 1e-06
    %v63 = vmul.f32 %v60, %v60
    %vm64 = vcmask 261120
    %v65 = vsel %vm64, %v63, 0.0
    %66 = vadd.xlane.f32.xlu0 %v65
    %v67 = vpop.xlane.xlu0 %66
    %v68 = vmul.f32 %v62, %v62
    %v69 = vsel %vm64, %v68, 0.0
    %70 = vadd.xlane.f32.xlu0 %v69
    %v71 = vpop.xlane.xlu0 %70
    %v72 = vsub.f32 %v67, %v71
    %v73 = vadd.f32 %v72, 1.0
    %v74 = vmax.f32 %v73, 0.0
    %v75 = vlaneseq
    %v76 = vshrl.u32 %v75, 7
    %s77 = smul.u32 0, 8
    %v78 = vstv %s77
    %v79 = vadd.s32 %v76, %v78
    %vm80 = vcmp.lt.s32.totalorder %v79, 8
    %v81 = vsel %vm80, %v74, 0.0
    %vm82 = vcmask 7168
    %v83 = vsel %vm82, %v81, 0.0
    %84 = vadd.xlane.f32.xlu0 %v83
    %v85 = vpop.xlane.xlu0 %84
    %v86 = vrot.slane %v85, 4
    %v87 = vadd.f32 %v85, %v86
    %v88 = vrot.slane %v87, 2
    %v89 = vadd.f32 %v87, %v88
    %v90 = vrot.slane %v89, 1
    %v91 = vadd.f32 %v89, %v90
    %s92 = vtos %v91
    %s93 = scalar_lea.smem [#allocation8], 0
    %94 = sst [smem:[%s93]] %s92
    // Predicated region
    $region26: #{tpu_custom_call.1} parent=1 // pred_check
      _
    $region27: #{tpu_custom_call.1} parent=1 // pred_check_branch
      %96 = sbr.rel (0) target = $region29
    $region28: #{tpu_custom_call.1} parent=1 // pred_region
      %98 = vsyncadd [#allocation4], 0
      %s100 = sshll.u32 %s3, 4
      %s101 = int_to_ptr.hbm [resolvable:$true] %s100
      %103 = dma.smem_to_hbm [#allocation8], 16, %s101, [#allocation4]
    $region29: #{tpu_custom_call.1} parent=1 // pred_fallthru
      _
    // Predicated region
    $region30: #{tpu_custom_call.1} parent=1 // pred_check
      _
    $region31: #{tpu_custom_call.1} parent=1 // pred_check_branch
      %105 = sbr.rel (0) target = $region33
    $region32: #{tpu_custom_call.1} parent=1 // pred_region
      %107 = dma.done [#allocation4], 16
    $region33: #{tpu_custom_call.1} parent=1 // pred_fallthru
      _
    %108 = sfence
    %109 = vsyncpa [#allocation3], 1
    %110 = vsyncpa [#allocation6], 1
    %111 = vsyncpa [#allocation4], 1

</llo_original>
